<compile_context>
chip_gen: v7x
topology: tpu7x:2x2x1
jax: 0.10.0
libtpu: 0.0.40
codegen_flags: <defaults>
</compile_context>

<pallas_src>
import jax
import jax.numpy as jnp
from jax.experimental import pallas as pl
from jax.experimental.pallas import tpu as pltpu


def senet_kernel(x_ref, w1t_ref, b1_ref, w2_ref, b2_ref, o_ref):
    """One image per grid step.

    x_ref  : (C, HW)  storage dtype (f32 or bf16)
    w1t_ref: (C, Cr)  f32   fc1 weight, pre-transposed to (in, out)
    b1_ref : (1, Cr)  f32
    w2_ref : (C, Cr)  f32   fc2 weight, native PyTorch layout (out, in)
    b2_ref : (C, 1)   f32
    o_ref  : (C, HW)  storage dtype
    """
    # --- squeeze: AdaptiveAvgPool2d((1,1)) == mean over HW (lanes), f32 acc --
    pooled = jnp.mean(x_ref[...].astype(jnp.float32), axis=-1, keepdims=True)  # (C, 1)

    # --- excitation: two tiny FCs on VPU + XLU (skip the MXU round-trip) -----
    # fc1 + ReLU: h[0, j] = sum_c pooled[c, 0] * W1^T[c, j] + b1[j]
    h = jnp.sum(pooled * w1t_ref[...], axis=0, keepdims=True) + b1_ref[...]    # (1, Cr)
    h = jnp.maximum(h, 0.0)
    # fc2 + sigmoid: s[c, 0] = sum_j h[0, j] * W2[c, j] + b2[c]
    s = jnp.sum(h * w2_ref[...], axis=-1, keepdims=True) + b2_ref[...]         # (C, 1)
    s = jax.nn.sigmoid(s)

    # --- rescale: re-read the VMEM-resident block, lane-broadcast multiply ---
    o_ref[...] = (x_ref[...].astype(jnp.float32) * s).astype(o_ref.dtype)


def senet_forward(x_nchw, w1, b1, w2, b2):
    """SE block forward.

    x_nchw: (N, C, H, W), f32 or bf16 storage.
    w1: (Cr, C)  fc1 weight (PyTorch nn.Linear layout);  b1: (Cr,)
    w2: (C, Cr)  fc2 weight (PyTorch nn.Linear layout);  b2: (C,)
    """
    N, C, H, W = x_nchw.shape
    Cr = w1.shape[0]
    HW = H * W

    x3 = x_nchw.reshape(N, C, HW)
    # Weight layouts chosen so the in-kernel FCs need no transposes.
    w1_t = jnp.asarray(w1, jnp.float32).T             # (C, Cr)
    b1_r = jnp.asarray(b1, jnp.float32).reshape(1, Cr)
    w2_n = jnp.asarray(w2, jnp.float32)               # (C, Cr)
    b2_c = jnp.asarray(b2, jnp.float32).reshape(C, 1)

    itemsize = jnp.dtype(x_nchw.dtype).itemsize
    block_bytes = C * HW * itemsize
    weight_bytes = (w1_t.size + b1_r.size + w2_n.size + b2_c.size) * 4
    # Double-buffered input + output blocks, resident weights, plus slack.
    vmem_needed = 4 * block_bytes + 2 * weight_bytes + (1 << 20)
    vmem_limit = int(min(max(vmem_needed, 32 << 20), 60 << 20))

    cost = pl.CostEstimate(
        flops=N * (3 * C * HW + 4 * C * Cr),          # pool + rescale + 2 FCs
        transcendentals=N * C,                        # sigmoid
        bytes_accessed=2 * N * C * HW * itemsize + weight_bytes,
    )

    out3 = pl.pallas_call(
        senet_kernel,
        out_shape=jax.ShapeDtypeStruct((N, C, HW), x_nchw.dtype),
        grid=(N,),
        in_specs=[
            pl.BlockSpec((None, C, HW), lambda n: (n, 0, 0)),   # x: one image/step
            pl.BlockSpec((C, Cr), lambda n: (0, 0)),            # weights: resident
            pl.BlockSpec((1, Cr), lambda n: (0, 0)),
            pl.BlockSpec((C, Cr), lambda n: (0, 0)),
            pl.BlockSpec((C, 1), lambda n: (0, 0)),
        ],
        out_specs=pl.BlockSpec((None, C, HW), lambda n: (n, 0, 0)),
        compiler_params=pltpu.CompilerParams(
            dimension_semantics=("parallel",),   # v7x: shard batch across 2 TCs
            vmem_limit_bytes=vmem_limit,
        ),
        cost_estimate=cost,
    )(x3, w1_t, b1_r, w2_n, b2_c)
    return out3.reshape(N, C, H, W)


def senet_reference(x_nchw, w1, b1, w2, b2):
    """Pure-JAX reference matching the PyTorch forward (f32 math)."""
    xf = x_nchw.astype(jnp.float32)
    pooled = jnp.mean(xf, axis=(2, 3))                           # (N, C)
    h = jnp.maximum(pooled @ jnp.asarray(w1, jnp.float32).T + b1, 0.0)
    s = jax.nn.sigmoid(h @ jnp.asarray(w2, jnp.float32).T + b2)
    return xf * s[:, :, None, None]


if __name__ == "__main__":
    # Module hyperparameters (small but consistent with the forward pass).
    N, C, H, W = 2, 32, 16, 16
    r = 16
    Cr = C // r  # = 2

    key = jax.random.PRNGKey(0)
    kx, kw1, kb1, kw2, kb2 = jax.random.split(key, 5)

    x = jax.random.normal(kx, (N, C, H, W), dtype=jnp.float32)

    # nn.Linear(in, out): weight (out, in), bias (out,), torch-style init range.
    lim1 = 1.0 / jnp.sqrt(jnp.float32(C))
    w1 = jax.random.uniform(kw1, (Cr, C), jnp.float32, -lim1, lim1)
    b1 = jax.random.uniform(kb1, (Cr,), jnp.float32, -lim1, lim1)
    lim2 = 1.0 / jnp.sqrt(jnp.float32(Cr))
    w2 = jax.random.uniform(kw2, (C, Cr), jnp.float32, -lim2, lim2)
    b2 = jax.random.uniform(kb2, (C,), jnp.float32, -lim2, lim2)

    # f32 storage: matches the PyTorch module semantics.
    out = jax.block_until_ready(senet_forward(x, w1, b1, w2, b2))
    ref = senet_reference(x, w1, b1, w2, b2)
    assert out.shape == (N, C, H, W)
    assert jnp.allclose(out, ref, atol=1e-5, rtol=1e-5), "f32 mismatch vs reference"

    # bf16 storage: halves HBM traffic on this bandwidth-bound kernel while the
    # squeeze / FC / sigmoid math stays in f32 inside the kernel.
    x_bf16 = x.astype(jnp.bfloat16)
    out_bf = jax.block_until_ready(senet_forward(x_bf16, w1, b1, w2, b2))
    ref_bf = senet_reference(x_bf16, w1, b1, w2, b2)
    assert out_bf.dtype == jnp.bfloat16
    assert jnp.allclose(out_bf.astype(jnp.float32), ref_bf, atol=5e-2, rtol=5e-2), \
        "bf16 mismatch vs reference"

    print("KERNEL_OK")
</pallas_src>

<mosaic_0001>
module attributes {stable_mosaic.version = 11 : i64} {
  func.func @senet_kernel(%arg0: i32, %arg1: memref<1x32x256xf32, #tpu.memory_space<vmem>>, %arg2: memref<32x2xf32, #tpu.memory_space<vmem>>, %arg3: memref<1x2xf32, #tpu.memory_space<vmem>>, %arg4: memref<32x2xf32, #tpu.memory_space<vmem>>, %arg5: memref<32x1xf32, #tpu.memory_space<vmem>>, %arg6: memref<1x32x256xf32, #tpu.memory_space<vmem>>) attributes {dimension_semantics = [#tpu.dimension_semantics<parallel>], iteration_bounds = array<i64: 2>, scalar_prefetch = 0 : i64, scratch_operands = 0 : i64, tpu.core_type = #tpu.core_type<tc>, window_params = [{transform_indices = @transform_0, window_bounds = array<i64: 1, 32, 256>}, {pipeline_mode = #tpu.pipeline_mode<synchronous>, transform_indices = @transform_1, window_bounds = array<i64: 32, 2>}, {pipeline_mode = #tpu.pipeline_mode<synchronous>, transform_indices = @transform_2, window_bounds = array<i64: 1, 2>}, {pipeline_mode = #tpu.pipeline_mode<synchronous>, transform_indices = @transform_3, window_bounds = array<i64: 32, 2>}, {pipeline_mode = #tpu.pipeline_mode<synchronous>, transform_indices = @transform_4, window_bounds = array<i64: 32, 1>}, {transform_indices = @transform_5, window_bounds = array<i64: 1, 32, 256>}]} {
    %c0 = arith.constant 0 : index
    %c0_0 = arith.constant 0 : index
    %c0_1 = arith.constant 0 : index
    %0 = vector.load %arg1[%c0, %c0_0, %c0_1] : memref<1x32x256xf32, #tpu.memory_space<vmem>>, vector<1x32x256xf32>
    %1 = vector.shape_cast %0 : vector<1x32x256xf32> to vector<32x256xf32>
    %cst = arith.constant dense<0.000000e+00> : vector<32xf32>
    %2 = vector.multi_reduction <add>, %1, %cst [1] : vector<32x256xf32> to vector<32xf32>
    %3 = vector.shape_cast %2 : vector<32xf32> to vector<32x1xf32>
    %cst_2 = arith.constant 2.560000e+02 : f32
    %4 = vector.broadcast %cst_2 : f32 to vector<32x1xf32>
    %5 = arith.divf %3, %4 : vector<32x1xf32>
    %c0_3 = arith.constant 0 : index
    %c0_4 = arith.constant 0 : index
    %6 = vector.load %arg2[%c0_3, %c0_4] : memref<32x2xf32, #tpu.memory_space<vmem>>, vector<32x2xf32>
    %7 = vector.broadcast %5 : vector<32x1xf32> to vector<32x2xf32>
    %8 = arith.mulf %7, %6 : vector<32x2xf32>
    %cst_5 = arith.constant dense<0.000000e+00> : vector<2xf32>
    %9 = vector.multi_reduction <add>, %8, %cst_5 [0] : vector<32x2xf32> to vector<2xf32>
    %10 = vector.shape_cast %9 : vector<2xf32> to vector<1x2xf32>
    %c0_6 = arith.constant 0 : index
    %c0_7 = arith.constant 0 : index
    %11 = vector.load %arg3[%c0_6, %c0_7] : memref<1x2xf32, #tpu.memory_space<vmem>>, vector<1x2xf32>
    %12 = arith.addf %10, %11 : vector<1x2xf32>
    %cst_8 = arith.constant 0.000000e+00 : f32
    %13 = vector.broadcast %cst_8 : f32 to vector<1x2xf32>
    %14 = arith.maximumf %12, %13 : vector<1x2xf32>
    %c0_9 = arith.constant 0 : index
    %c0_10 = arith.constant 0 : index
    %15 = vector.load %arg4[%c0_9, %c0_10] : memref<32x2xf32, #tpu.memory_space<vmem>>, vector<32x2xf32>
    %16 = vector.broadcast %14 : vector<1x2xf32> to vector<32x2xf32>
    %17 = arith.mulf %16, %15 : vector<32x2xf32>
    %cst_11 = arith.constant dense<0.000000e+00> : vector<32xf32>
    %18 = vector.multi_reduction <add>, %17, %cst_11 [1] : vector<32x2xf32> to vector<32xf32>
    %19 = vector.shape_cast %18 : vector<32xf32> to vector<32x1xf32>
    %c0_12 = arith.constant 0 : index
    %c0_13 = arith.constant 0 : index
    %20 = vector.load %arg5[%c0_12, %c0_13] : memref<32x1xf32, #tpu.memory_space<vmem>>, vector<32x1xf32>
    %21 = arith.addf %19, %20 : vector<32x1xf32>
    %22 = arith.negf %21 : vector<32x1xf32>
    %23 = math.exp %22 : vector<32x1xf32>
    %cst_14 = arith.constant 1.000000e+00 : f32
    %24 = vector.broadcast %cst_14 : f32 to vector<32x1xf32>
    %25 = arith.addf %24, %23 : vector<32x1xf32>
    %26 = arith.divf %24, %25 : vector<32x1xf32>
    %c0_15 = arith.constant 0 : index
    %c0_16 = arith.constant 0 : index
    %c0_17 = arith.constant 0 : index
    %27 = vector.load %arg1[%c0_15, %c0_16, %c0_17] : memref<1x32x256xf32, #tpu.memory_space<vmem>>, vector<1x32x256xf32>
    %28 = vector.shape_cast %27 : vector<1x32x256xf32> to vector<32x256xf32>
    %29 = vector.broadcast %26 : vector<32x1xf32> to vector<32x256xf32>
    %30 = arith.mulf %28, %29 : vector<32x256xf32>
    %c0_18 = arith.constant 0 : index
    %c0_19 = arith.constant 0 : index
    %c0_20 = arith.constant 0 : index
    %31 = vector.load %arg6[%c0_18, %c0_19, %c0_20] : memref<1x32x256xf32, #tpu.memory_space<vmem>>, vector<1x32x256xf32>
    %32 = vector.shape_cast %31 : vector<1x32x256xf32> to vector<32x256xf32>
    %33 = vector.shape_cast %30 : vector<32x256xf32> to vector<1x32x256xf32>
    tpu.vector_store %arg6[%c0_18, %c0_19, %c0_20], %33 {strides = array<i32>} : memref<1x32x256xf32, #tpu.memory_space<vmem>>, vector<1x32x256xf32>,
    return
  }
  func.func @transform_0(%arg0: i32) -> (i32, i32, i32) {
    %c0_i32 = arith.constant 0 : i32
    %c0_i32_0 = arith.constant 0 : i32
    %c0_i32_1 = arith.constant 0 : i32
    return %arg0, %c0_i32, %c0_i32_0 : i32, i32, i32
  }
  func.func @transform_1(%arg0: i32) -> (i32, i32) {
    %c0_i32 = arith.constant 0 : i32
    %c0_i32_0 = arith.constant 0 : i32
    %c0_i32_1 = arith.constant 0 : i32
    return %c0_i32, %c0_i32_0 : i32, i32
  }
  func.func @transform_2(%arg0: i32) -> (i32, i32) {
    %c0_i32 = arith.constant 0 : i32
    %c0_i32_0 = arith.constant 0 : i32
    %c0_i32_1 = arith.constant 0 : i32
    return %c0_i32, %c0_i32_0 : i32, i32
  }
  func.func @transform_3(%arg0: i32) -> (i32, i32) {
    %c0_i32 = arith.constant 0 : i32
    %c0_i32_0 = arith.constant 0 : i32
    %c0_i32_1 = arith.constant 0 : i32
    return %c0_i32, %c0_i32_0 : i32, i32
  }
  func.func @transform_4(%arg0: i32) -> (i32, i32) {
    %c0_i32 = arith.constant 0 : i32
    %c0_i32_0 = arith.constant 0 : i32
    %c0_i32_1 = arith.constant 0 : i32
    return %c0_i32, %c0_i32_0 : i32, i32
  }
  func.func @transform_5(%arg0: i32) -> (i32, i32, i32) {
    %c0_i32 = arith.constant 0 : i32
    %c0_i32_0 = arith.constant 0 : i32
    %c0_i32_1 = arith.constant 0 : i32
    return %arg0, %c0_i32, %c0_i32_0 : i32, i32, i32
  }
}

</mosaic_0001>

<llo_original>
// kernel: tpu_custom_call.1
$region0: #{tpu_custom_call.1}
  #allocation0 [shape = 'u32[]', space=smem, size = 0x4, offset = 0x4, fixed_abs, tag = 'smem constant byte address 0x4 - core index']
  #allocation1 [shape = 'u32[144,128]{1,0:T(1,128)}', space=vmem, size = 0x12000, scoped, tag = 'internal scratch']
  %s0 = inlined_call_operand.hbm [shape: f32[2,32,256], index: 0, kind: input, shape index: {}]
  %s1 = inlined_call_operand.vmem [shape: f32[32,2], index: 1, kind: input, shape index: {}]
  %s2 = inlined_call_operand.vmem [shape: f32[1,2], index: 2, kind: input, shape index: {}]
  %s3 = inlined_call_operand.vmem [shape: f32[32,2], index: 3, kind: input, shape index: {}]
  %s4 = inlined_call_operand.vmem [shape: f32[32,1], index: 4, kind: input, shape index: {}]
  %s5 = inlined_call_operand.hbm [shape: f32[2,32,256], index: 5, kind: output, shape index: {}]
  %s6 = sld [smem:[#allocation0]]
  $region57: #{tpu_custom_call.1} parent=0
    _
  %s8 = ssub.s32 1, %s6
  %s9 = scalar_select 0, %s8, %s6
  $region1: #{tpu_custom_call.1} parent=0
    #allocation2 [shape = 'u8[65536]{0}', space=vmem, size = 0x10000, scoped, tag = 'input window, operand 0']
    #allocation3 [shape = 's32[2]{0}', space=sflag, size = 0x8, scoped, tag = 'scoped memory for tpu_custom_call.1']
    #allocation4 [shape = 's32[2]{0}', space=sflag, size = 0x8, scoped, tag = 'scoped memory for tpu_custom_call.1']
    #allocation5 [shape = 'u8[65536]{0}', space=vmem, size = 0x10000, scoped, tag = 'output window, operand 0']
    %10 = vsyncpa [#allocation3], 0
    %s11 = scalar_lea.sflag [#allocation3], 1
    %12 = vsyncpa %s11, 0
    %13 = vsyncpa [#allocation4], 0
    %s14 = scalar_lea.sflag [#allocation4], 1
    %15 = vsyncpa %s14, 0
    loop: start=0, step=1, limit=4
    $region2: #{tpu_custom_call.1} parent=1 // loop_pre_header
      _
    $region3: #{tpu_custom_call.1} parent=1 // loop_header
      %s17 = sphi 0, %s21
      %p18 = scmp.ge.s32.totalorder %s17, 4
      %s27 = sphi 0, %s29
      %s30 = sphi 0, %s27
      %s31 = sphi 0, %s30
      %s47 = sphi 0, %s31
      %s51 = sphi 0, %s51
      %s53 = sphi 0, %s51
      %s54 = sphi 0, %s53
      %s68 = sphi 0, %s54
      %s72 = sphi 0, %s72
      %s74 = sphi 0, %s72
      %s75 = sphi 0, %s74
      %s89 = sphi 0, %s75
      %s93 = sphi 0, %s93
      %s95 = sphi 0, %s93
      %s96 = sphi 0, %s95
      %s110 = sphi 0, %s96
      %s114 = sphi 0, %s114
      %s116 = sphi 0, %s114
      %s117 = sphi 0, %s116
      %s131 = sphi 0, %s117
      %s137 = sphi 0, %s139
      %s140 = sphi 0, %s137
      %s141 = sphi 0, %s140
      %s157 = sphi 0, %s141
    $region4: #{tpu_custom_call.1} parent=1 // loop_header_branch
      %20 = sbr.rel (%p18) target = $region8
    $region5: #{tpu_custom_call.1} parent=1 // loop_body
      %s22 = ssub.s32 %s17, 1
      %s23 = ssub.s32 %s17, 2
      %s24 = sadd.s32 %s17, 1
      %s25 = ssub.s32 %s17, %s24
      %p26 = scmp.eq.s32.totalorder %s25, 0
      %s28 = sadd.s32 %s27, 1
      %s29 = scalar_select %p26, %s27, %s28
      %p32 = pneg %p26
      %p33 = scmp.eq.s32.totalorder %s17, 1
      %p34 = por %p32, %p33
      %p35 = scmp.ne.s32.totalorder %s27, %s30
      %p36 = scmp.eq.s32.totalorder %s17, 0
      %p37 = por %p35, %p36
      %p38 = scmp.ne.s32.totalorder %s27, %s30
      %p39 = scmp.eq.s32.totalorder %s22, 1
      %p40 = por %p38, %p39
      %p41 = scmp.ne.s32.totalorder %s30, %s31
      %p42 = scmp.eq.s32.totalorder %s22, 0
      %p43 = por %p41, %p42
      %p44 = scmp.ne.s32.totalorder %s30, %s31
      %p45 = scmp.eq.s32.totalorder %s23, 1
      %p46 = por %p44, %p45
      %p48 = scmp.ne.s32.totalorder %s31, %s47
      %p49 = scmp.eq.s32.totalorder %s23, 0
      %p50 = por %p48, %p49
      %s52 = sadd.s32 %s51, 1
      %p55 = scmp.eq.s32.totalorder %s17, 1
      %p56 = scmp.ne.s32.totalorder %s51, %s53
      %p57 = scmp.eq.s32.totalorder %s17, 0
      %p58 = por %p56, %p57
      %p59 = scmp.ne.s32.totalorder %s51, %s53
      %p60 = scmp.eq.s32.totalorder %s22, 1
      %p61 = por %p59, %p60
      %p62 = scmp.ne.s32.totalorder %s53, %s54
      %p63 = scmp.eq.s32.totalorder %s22, 0
      %p64 = por %p62, %p63
      %p65 = scmp.ne.s32.totalorder %s53, %s54
      %p66 = scmp.eq.s32.totalorder %s23, 1
      %p67 = por %p65, %p66
      %p69 = scmp.ne.s32.totalorder %s54, %s68
      %p70 = scmp.eq.s32.totalorder %s23, 0
      %p71 = por %p69, %p70
      %s73 = sadd.s32 %s72, 1
      %p76 = scmp.eq.s32.totalorder %s17, 1
      %p77 = scmp.ne.s32.totalorder %s72, %s74
      %p78 = scmp.eq.s32.totalorder %s17, 0
      %p79 = por %p77, %p78
      %p80 = scmp.ne.s32.totalorder %s72, %s74
      %p81 = scmp.eq.s32.totalorder %s22, 1
      %p82 = por %p80, %p81
      %p83 = scmp.ne.s32.totalorder %s74, %s75
      %p84 = scmp.eq.s32.totalorder %s22, 0
      %p85 = por %p83, %p84
      %p86 = scmp.ne.s32.totalorder %s74, %s75
      %p87 = scmp.eq.s32.totalorder %s23, 1
      %p88 = por %p86, %p87
      %p90 = scmp.ne.s32.totalorder %s75, %s89
      %p91 = scmp.eq.s32.totalorder %s23, 0
      %p92 = por %p90, %p91
      %s94 = sadd.s32 %s93, 1
      %p97 = scmp.eq.s32.totalorder %s17, 1
      %p98 = scmp.ne.s32.totalorder %s93, %s95
      %p99 = scmp.eq.s32.totalorder %s17, 0
      %p100 = por %p98, %p99
      %p101 = scmp.ne.s32.totalorder %s93, %s95
      %p102 = scmp.eq.s32.totalorder %s22, 1
      %p103 = por %p101, %p102
      %p104 = scmp.ne.s32.totalorder %s95, %s96
      %p105 = scmp.eq.s32.totalorder %s22, 0
      %p106 = por %p104, %p105
      %p107 = scmp.ne.s32.totalorder %s95, %s96
      %p108 = scmp.eq.s32.totalorder %s23, 1
      %p109 = por %p107, %p108
      %p111 = scmp.ne.s32.totalorder %s96, %s110
      %p112 = scmp.eq.s32.totalorder %s23, 0
      %p113 = por %p111, %p112
      %s115 = sadd.s32 %s114, 1
      %p118 = scmp.eq.s32.totalorder %s17, 1
      %p119 = scmp.ne.s32.totalorder %s114, %s116
      %p120 = scmp.eq.s32.totalorder %s17, 0
      %p121 = por %p119, %p120
      %p122 = scmp.ne.s32.totalorder %s114, %s116
      %p123 = scmp.eq.s32.totalorder %s22, 1
      %p124 = por %p122, %p123
      %p125 = scmp.ne.s32.totalorder %s116, %s117
      %p126 = scmp.eq.s32.totalorder %s22, 0
      %p127 = por %p125, %p126
      %p128 = scmp.ne.s32.totalorder %s116, %s117
      %p129 = scmp.eq.s32.totalorder %s23, 1
      %p130 = por %p128, %p129
      %p132 = scmp.ne.s32.totalorder %s117, %s131
      %p133 = scmp.eq.s32.totalorder %s23, 0
      %p134 = por %p132, %p133
      %s135 = ssub.s32 %s17, %s24
      %p136 = scmp.eq.s32.totalorder %s135, 0
      %s138 = sadd.s32 %s137, 1
      %s139 = scalar_select %p136, %s137, %s138
      %p142 = pneg %p136
      %p143 = scmp.eq.s32.totalorder %s17, 1
      %p144 = por %p142, %p143
      %p145 = scmp.ne.s32.totalorder %s137, %s140
      %p146 = scmp.eq.s32.totalorder %s17, 0
      %p147 = por %p145, %p146
      %p148 = scmp.ne.s32.totalorder %s137, %s140
      %p149 = scmp.eq.s32.totalorder %s22, 1
      %p150 = por %p148, %p149
      %p151 = scmp.ne.s32.totalorder %s140, %s141
      %p152 = scmp.eq.s32.totalorder %s22, 0
      %p153 = por %p151, %p152
      %p154 = scmp.ne.s32.totalorder %s140, %s141
      %p155 = scmp.eq.s32.totalorder %s23, 1
      %p156 = por %p154, %p155
      %p158 = scmp.ne.s32.totalorder %s141, %s157
      %p159 = scmp.eq.s32.totalorder %s23, 0
      %p160 = por %p158, %p159
      %p161 = scmp.le.s32.totalorder 1, %s17
      %p162 = scmp.lt.s32.totalorder %s17, 3
      %p163 = pnand %p161, %p162
      %p164 = pneg %p163
      // Predicated region
      $region9: #{tpu_custom_call.1} parent=5 // pred_check
        _
      $region10: #{tpu_custom_call.1} parent=5 // pred_check_branch
        %166 = sbr.rel (%p163) target = $region12
      $region11: #{tpu_custom_call.1} parent=5 // pred_region
        %s167 = ssub.s32 %s17, 1
        // Predicated region
        $region13: #{tpu_custom_call.1} parent=11 // pred_check
          %p168 = pneg %p64
        $region14: #{tpu_custom_call.1} parent=11 // pred_check_branch
          %170 = sbr.rel (%p168) target = $region16
        $region15: #{tpu_custom_call.1} parent=11 // pred_region
          _
        $region16: #{tpu_custom_call.1} parent=11 // pred_fallthru
          _
        // Predicated region
        $region17: #{tpu_custom_call.1} parent=11 // pred_check
          %p171 = pneg %p85
        $region18: #{tpu_custom_call.1} parent=11 // pred_check_branch
          %173 = sbr.rel (%p171) target = $region20
        $region19: #{tpu_custom_call.1} parent=11 // pred_region
          _
        $region20: #{tpu_custom_call.1} parent=11 // pred_fallthru
          _
        // Predicated region
        $region21: #{tpu_custom_call.1} parent=11 // pred_check
          %p174 = pneg %p106
        $region22: #{tpu_custom_call.1} parent=11 // pred_check_branch
          %176 = sbr.rel (%p174) target = $region24
        $region23: #{tpu_custom_call.1} parent=11 // pred_region
          _
        $region24: #{tpu_custom_call.1} parent=11 // pred_fallthru
          _
        // Predicated region
        $region25: #{tpu_custom_call.1} parent=11 // pred_check
          %p177 = pneg %p127
        $region26: #{tpu_custom_call.1} parent=11 // pred_check_branch
          %179 = sbr.rel (%p177) target = $region28
        $region27: #{tpu_custom_call.1} parent=11 // pred_region
          _
        $region28: #{tpu_custom_call.1} parent=11 // pred_fallthru
          _
      $region12: #{tpu_custom_call.1} parent=5 // pred_fallthru
        _
      %p180 = scmp.lt.s32.totalorder %s17, 2
      // Predicated region
      $region29: #{tpu_custom_call.1} parent=5 // pred_check
        %p181 = pneg %p180
      $region30: #{tpu_custom_call.1} parent=5 // pred_check_branch
        %183 = sbr.rel (%p181) target = $region32
      $region31: #{tpu_custom_call.1} parent=5 // pred_region
        // Predicated region
        $region33: #{tpu_custom_call.1} parent=31 // pred_check
          %p184 = pneg %p37
        $region34: #{tpu_custom_call.1} parent=31 // pred_check_branch
          %186 = sbr.rel (%p184) target = $region36
        $region35: #{tpu_custom_call.1} parent=31 // pred_region
          %s187 = sand.u32 %s27, 1
          %s188 = scalar_lea.sflag [#allocation3], %s187
          %s189 = sand.u32 %s27, 1
          %s190 = smul.addr %s189, 64
          %s191 = scalar_lea.vmem [#allocation2], %s190
          %s193 = ssub.s32 1024, 1024
          %194 = vsyncadd %s188, %s193
          %s195 = smul.addr %s17, 8
          %s196 = smul.addr %s195, 128
          %s197 = scalar_lea.hbm %s0, %s196
          %s198 = sshll.u32 %s191, 4
          %s199 = int_to_ptr.vmem [resolvable:$true] %s198
          %204 = dma.hbm_to_vmem [thread:$0]  %s197, 1024, %s199, %s188, 256, 256, 16
        $region36: #{tpu_custom_call.1} parent=31 // pred_fallthru
          _
      $region32: #{tpu_custom_call.1} parent=5 // pred_fallthru
        _
      %p205 = scmp.le.s32.totalorder 1, %s17
      %p206 = scmp.lt.s32.totalorder %s17, 3
      %p207 = pnand %p205, %p206
      %p208 = pneg %p207
      // Predicated region
      $region37: #{tpu_custom_call.1} parent=5 // pred_check
        _
      $region38: #{tpu_custom_call.1} parent=5 // pred_check_branch
        %210 = sbr.rel (%p207) target = $region40
      $region39: #{tpu_custom_call.1} parent=5 // pred_region
        %s211 = ssub.s32 %s17, 1
        %s212 = sand.u32 %s30, 1
        %s213 = scalar_lea.sflag [#allocation3], %s212
        %s214 = sand.u32 %s30, 1
        %s215 = smul.addr %s214, 64
        %s216 = scalar_lea.vmem [#allocation2], %s215
        // Predicated region
        $region41: #{tpu_custom_call.1} parent=39 // pred_check
          %p217 = pneg %p43
        $region42: #{tpu_custom_call.1} parent=39 // pred_check_branch
          %219 = sbr.rel (%p217) target = $region44
        $region43: #{tpu_custom_call.1} parent=39 // pred_region
          %220 = dma.done %s213, 1024
        $region44: #{tpu_custom_call.1} parent=39 // pred_fallthru
          _
        %s221 = sand.u32 %s30, 1
        %s222 = scalar_lea.sflag [#allocation3], %s221
        %s223 = sand.u32 %s30, 1
        %s224 = smul.addr %s223, 64
        %s225 = scalar_lea.vmem [#allocation2], %s224
        %p226 = pneg %p43
        %p227 = pneg %p40
        %p228 = pneg %p64
        %p229 = pneg %p61
        %p230 = pneg %p85
        %p231 = pneg %p82
        %p232 = pneg %p106
        %p233 = pneg %p103
        %p234 = pneg %p127
        %p235 = pneg %p124
        %p236 = pneg %p153
        %p237 = pneg %p150
        %s238 = sand.u32 %s140, 1
        %s239 = scalar_lea.sflag [#allocation4], %s238
        %s240 = sand.u32 %s140, 1
        %s241 = smul.addr %s240, 64
        %s242 = scalar_lea.vmem [#allocation5], %s241
        %v243 = vld [vmem:[%s216] sm:$0xff]
        %v244 = vld [vmem:[%s216 + $0x8] sm:$0xff]
        %v245 = vld [vmem:[%s216 + $0x10] sm:$0xff]
        %v246 = vld [vmem:[%s216 + $0x18] sm:$0xff]
        %v247 = vld [vmem:[%s216 + $0x20] sm:$0xff]
        %v248 = vld [vmem:[%s216 + $0x28] sm:$0xff]
        %v249 = vld [vmem:[%s216 + $0x30] sm:$0xff]
        %v250 = vld [vmem:[%s216 + $0x38] sm:$0xff]
        %v251 = vadd.f32 %v243, %v244
        %252 = vadd.xlane.f32.xlu0 %v251
        %v253 = vpop.xlane.xlu0 %252
        %v254 = vadd.f32 %v245, %v246
        %255 = vadd.xlane.f32.xlu0 %v254
        %v256 = vpop.xlane.xlu0 %255
        %v257 = vadd.f32 %v247, %v248
        %258 = vadd.xlane.f32.xlu0 %v257
        %v259 = vpop.xlane.xlu0 %258
        %v260 = vadd.f32 %v249, %v250
        %261 = vadd.xlane.f32.xlu0 %v260
        %v262 = vpop.xlane.xlu0 %261
        %v263 = vrcp.pop 256.0
        %v264 = vmul.f32 %v253, %v263
        %v265 = vmul.f32 %v256, %v263
        %v266 = vmul.f32 %v259, %v263
        %v267 = vmul.f32 %v262, %v263
        %v268 = vld [vmem:[%s1] sm:$0xff]
        %v269 = vld [vmem:[%s1 + $0x8] sm:$0xff]
        %v270 = vld [vmem:[%s1 + $0x10] sm:$0xff]
        %v271 = vld [vmem:[%s1 + $0x18] sm:$0xff]
        %v272 = vmul.f32 %v264, %v268
        %v273 = vmul.f32 %v265, %v269
        %v274 = vmul.f32 %v266, %v270
        %v275 = vmul.f32 %v267, %v271
        %vm276 = vcmask 15360
        %v277 = vsel %vm276, %v272, 0.0
        %v278 = vsel %vm276, %v273, 0.0
        %v279 = vadd.f32 %v277, %v278
        %v280 = vsel %vm276, %v274, 0.0
        %v281 = vadd.f32 %v279, %v280
        %v282 = vsel %vm276, %v275, 0.0
        %v283 = vadd.f32 %v281, %v282
        %v284 = vrot.slane %v283, 4
        %v285 = vadd.f32 %v283, %v284
        %v286 = vrot.slane %v285, 2
        %v287 = vadd.f32 %v285, %v286
        %v288 = vrot.slane %v287, 1
        %v289 = vadd.f32 %v287, %v288
        %v290 = vld [vmem:[%s2] sm:$0x1]
        %v291 = vadd.f32 %v289, %v290
        %v292 = vmax.f32 %v291, 0.0
        %v293 = vld [vmem:[%s3] sm:$0xff]
        %v294 = vld [vmem:[%s3 + $0x8] sm:$0xff]
        %v295 = vld [vmem:[%s3 + $0x10] sm:$0xff]
        %v296 = vld [vmem:[%s3 + $0x18] sm:$0xff]
        %v297 = vlaneseq
        %v298 = vshrl.u32 %v297, 7
        %v299 = vsub.s32 0, %v298
        %v300 = vrot.slane %v292, %v299
        %v301 = vmul.f32 %v300, %v293
        %v302 = vmul.f32 %v300, %v294
        %v303 = vmul.f32 %v300, %v295
        %v304 = vmul.f32 %v300, %v296
        %v305 = vsel %vm276, %v301, 0.0
        %306 = vadd.xlane.f32.xlu0 %v305
        %v307 = vpop.xlane.xlu0 %306
        %v308 = vsel %vm276, %v302, 0.0
        %309 = vadd.xlane.f32.xlu0 %v308
        %v310 = vpop.xlane.xlu0 %309
        %v311 = vsel %vm276, %v303, 0.0
        %312 = vadd.xlane.f32.xlu0 %v311
        %v313 = vpop.xlane.xlu0 %312
        %v314 = vsel %vm276, %v304, 0.0
        %315 = vadd.xlane.f32.xlu0 %v314
        %v316 = vpop.xlane.xlu0 %315
        %v317 = vld [vmem:[%s4] sm:$0xff]
        %v318 = vld [vmem:[%s4 + $0x8] sm:$0xff]
        %v319 = vld [vmem:[%s4 + $0x10] sm:$0xff]
        %v320 = vld [vmem:[%s4 + $0x18] sm:$0xff]
        %v321 = vadd.f32 %v307, %v317
        %v322 = vadd.f32 %v310, %v318
        %v323 = vadd.f32 %v313, %v319
        %v324 = vadd.f32 %v316, %v320
        %v325 = vxor.u32 %v321, 2147483648
        %v326 = vxor.u32 %v322, 2147483648
        %v327 = vxor.u32 %v323, 2147483648
        %v328 = vxor.u32 %v324, 2147483648
        %v329 = vmul.f32 %v325, 1.442695
        %v330 = vpow.pop %v329
        %v331 = vmul.f32 %v326, 1.442695
        %v332 = vpow.pop %v331
        %v333 = vmul.f32 %v327, 1.442695
        %v334 = vpow.pop %v333
        %v335 = vmul.f32 %v328, 1.442695
        %v336 = vpow.pop %v335
        %v337 = vadd.f32 %v330, 1.0
        %v338 = vadd.f32 %v332, 1.0
        %v339 = vadd.f32 %v334, 1.0
        %v340 = vadd.f32 %v336, 1.0
        %v341 = vrcp.pop %v337
        %v342 = vmul.f32 1.0, %v341
        %v343 = vrcp.pop %v338
        %v344 = vmul.f32 1.0, %v343
        %v345 = vrcp.pop %v339
        %v346 = vmul.f32 1.0, %v345
        %v347 = vrcp.pop %v340
        %v348 = vmul.f32 1.0, %v347
        %350 = vset.pattern.permute.xlu0 0
        %351 = vperm.xlu0 %350, %v342
        %v352 = vpop.permute.xlu0 %351
        %355 = vset.pattern.permute.xlu0 0
        %356 = vperm.xlu0 %355, %v344
        %v357 = vpop.permute.xlu0 %356
        %360 = vset.pattern.permute.xlu0 0
        %361 = vperm.xlu0 %360, %v346
        %v362 = vpop.permute.xlu0 %361
        %365 = vset.pattern.permute.xlu0 0
        %366 = vperm.xlu0 %365, %v348
        %v367 = vpop.permute.xlu0 %366
        %v369 = vmul.f32 %v243, %v352
        %v370 = vmul.f32 %v244, %v352
        %v371 = vmul.f32 %v245, %v357
        %v372 = vmul.f32 %v246, %v357
        %v373 = vmul.f32 %v247, %v362
        %v374 = vmul.f32 %v248, %v362
        %v375 = vmul.f32 %v249, %v367
        %v376 = vmul.f32 %v250, %v367
        %377 = vst [vmem:[%s242] sm:$0xff] %v369
        %378 = vst [vmem:[%s242 + $0x8] sm:$0xff] %v370
        %379 = vst [vmem:[%s242 + $0x10] sm:$0xff] %v371
        %380 = vst [vmem:[%s242 + $0x18] sm:$0xff] %v372
        %381 = vst [vmem:[%s242 + $0x20] sm:$0xff] %v373
        %382 = vst [vmem:[%s242 + $0x28] sm:$0xff] %v374
        %383 = vst [vmem:[%s242 + $0x30] sm:$0xff] %v375
        %384 = vst [vmem:[%s242 + $0x38] sm:$0xff] %v376
        %s385 = sand.u32 %s140, 1
        %s386 = scalar_lea.sflag [#allocation4], %s385
        %s387 = sand.u32 %s140, 1
        %s388 = smul.addr %s387, 64
        %s389 = scalar_lea.vmem [#allocation5], %s388
        // Predicated region
        $region45: #{tpu_custom_call.1} parent=39 // pred_check
          %p390 = pneg %p150
        $region46: #{tpu_custom_call.1} parent=39 // pred_check_branch
          %392 = sbr.rel (%p390) target = $region48
        $region47: #{tpu_custom_call.1} parent=39 // pred_region
          %s394 = ssub.s32 1024, 1024
          %395 = vsyncadd %s386, %s394
          %s396 = smul.addr %s22, 8
          %s397 = smul.addr %s396, 128
          %s398 = scalar_lea.hbm %s5, %s397
          %s399 = sshll.u32 %s389, 4
          %s400 = int_to_ptr.vmem [resolvable:$true] %s399
          %405 = dma.vmem_to_hbm [thread:$0]  %s400, 1024, %s398, %s386, 256, 256, 16
        $region48: #{tpu_custom_call.1} parent=39 // pred_fallthru
          _
      $region40: #{tpu_custom_call.1} parent=5 // pred_fallthru
        _
      %p406 = scmp.le.s32.totalorder 2, %s17
      // Predicated region
      $region49: #{tpu_custom_call.1} parent=5 // pred_check
        %p407 = pneg %p406
      $region50: #{tpu_custom_call.1} parent=5 // pred_check_branch
        %409 = sbr.rel (%p407) target = $region52
      $region51: #{tpu_custom_call.1} parent=5 // pred_region
        %s410 = ssub.s32 %s17, 2
        // Predicated region
        $region53: #{tpu_custom_call.1} parent=51 // pred_check
          %p411 = pneg %p156
        $region54: #{tpu_custom_call.1} parent=51 // pred_check_branch
          %413 = sbr.rel (%p411) target = $region56
        $region55: #{tpu_custom_call.1} parent=51 // pred_region
          %s414 = sand.u32 %s141, 1
          %s415 = scalar_lea.sflag [#allocation4], %s414
          %s416 = sand.u32 %s141, 1
          %s417 = smul.addr %s416, 64
          %s418 = scalar_lea.vmem [#allocation5], %s417
          %419 = dma.done %s415, 1024
        $region56: #{tpu_custom_call.1} parent=51 // pred_fallthru
          _
      $region52: #{tpu_custom_call.1} parent=5 // pred_fallthru
        _
    $region6: #{tpu_custom_call.1} parent=1 // loop_footer
      %s21 = sadd.s32 1, %s17
    $region7: #{tpu_custom_call.1} parent=1 // loop_footer_branch
      %16 = sbr.rel target = $region3
    $region8: #{tpu_custom_call.1} parent=1 // loop_exit
      _
    %420 = vsyncpa [#allocation3], 1
    %s421 = scalar_lea.sflag [#allocation3], 1
    %422 = vsyncpa %s421, 1
    %423 = vsyncpa [#allocation4], 1
    %s424 = scalar_lea.sflag [#allocation4], 1
    %425 = vsyncpa %s424, 1

</llo_original>
